<compile_context>
chip_gen: v7x
topology: tpu7x:2x2x1
jax: 0.10.0
libtpu: 0.0.40
codegen_flags: <defaults>
</compile_context>

<pallas_src>
import math
import functools
from itertools import accumulate

import numpy as np
import jax
import jax.numpy as jnp
from jax.experimental import pallas as pl
from jax.experimental.pallas import tpu as pltpu

INNER_DIM = 256
SQRT2 = math.sqrt(2.0)
LN_EPS = 1e-12

try:
    _VMEM_CAP = int(pltpu.get_tpu_info().vmem_capacity_bytes)
except Exception:            # pragma: no cover - fallback when query is unavailable
    _VMEM_CAP = 64 << 20
VMEM_LIMIT = min(96 << 20, max(32 << 20, (_VMEM_CAP * 3) // 4))


def _cparams(*sems):
    return pltpu.CompilerParams(dimension_semantics=tuple(sems),
                                vmem_limit_bytes=VMEM_LIMIT)


def _gelu_exact(x):
    # matches torch.nn.GELU() / F.gelu default (erf form)
    return 0.5 * x * (1.0 + jax.lax.erf(x / SQRT2))


def _pick_tile(n, cap, align):
    """Largest tile <= cap that divides n and is a multiple of `align`; else full n."""
    if n <= cap:
        return n
    t = (cap // align) * align
    while t >= align:
        if n % t == 0:
            return t
        t -= align
    return n


# ----------------------------- parameter containers (kernel-ready) -----------------------------

def make_dense(key, in_dim, out_dim, scale=0.02):
    """Weight stored pre-transposed (K, N) bf16; bias (1, N) f32 -> zero per-call prep."""
    kw, kb = jax.random.split(key)
    w = scale * jax.random.normal(kw, (in_dim, out_dim), jnp.float32)
    b = scale * jax.random.normal(kb, (out_dim,), jnp.float32)
    return {"w": w.astype(jnp.bfloat16), "b": b.reshape(1, out_dim)}


def make_ln(dim):
    return {"g": jnp.ones((1, dim), jnp.float32), "b": jnp.zeros((1, dim), jnp.float32)}


# ----------------------------- fused linear (+gelu / +residual / +LN) -----------------------------

def _linear_kernel(*refs, act, has_res, has_ln):
    x_ref, w_ref, b_ref = refs[0], refs[1], refs[2]
    o_ref = refs[-1]
    idx = 3
    y = jnp.dot(x_ref[...], w_ref[...], preferred_element_type=jnp.float32) + b_ref[...]
    if act == "gelu":
        y = _gelu_exact(y)
    if has_res:
        y = y + refs[idx][...]
        idx += 1
    if has_ln:
        g = refs[idx][...]
        be = refs[idx + 1][...]
        mu = jnp.mean(y, axis=-1, keepdims=True)
        var = jnp.mean(jnp.square(y - mu), axis=-1, keepdims=True)
        y = (y - mu) * jax.lax.rsqrt(var + LN_EPS) * g + be
    o_ref[...] = y.astype(o_ref.dtype)


@functools.partial(jax.jit, static_argnames=("act", "out_dtype"))
def _linear_impl(x, w, b, res, ln_g, ln_b, act, out_dtype):
    has_res = res is not None
    has_ln = ln_g is not None
    M, K = x.shape
    N = w.shape[1]
    xb = x if x.dtype == jnp.bfloat16 else x.astype(jnp.bfloat16)
    tm = _pick_tile(M, 512, 16)                           # 16-row alignment for bf16 packing
    # keep the whole bf16 weight resident when it fits -> DMA'd once per call (no re-streaming)
    if has_ln or (K * N * 2) <= (8 << 20):
        tn = N
    else:
        tn = _pick_tile(N, 2048, 128)

    args = [xb, w, b]
    in_specs = [pl.BlockSpec((tm, K), lambda i, j: (i, 0)),
                pl.BlockSpec((K, tn), lambda i, j: (0, j)),
                pl.BlockSpec((1, tn), lambda i, j: (0, j))]
    if has_res:
        args.append(res.astype(jnp.float32))
        in_specs.append(pl.BlockSpec((tm, tn), lambda i, j: (i, j)))
    if has_ln:
        args += [ln_g, ln_b]
        in_specs += [pl.BlockSpec((1, tn), lambda i, j: (0, j)),
                     pl.BlockSpec((1, tn), lambda i, j: (0, j))]
    return pl.pallas_call(
        functools.partial(_linear_kernel, act=act, has_res=has_res, has_ln=has_ln),
        out_shape=jax.ShapeDtypeStruct((M, N), out_dtype),
        grid=(M // tm, N // tn),
        in_specs=in_specs,
        out_specs=pl.BlockSpec((tm, tn), lambda i, j: (i, j)),
        compiler_params=_cparams("parallel", "parallel"),
    )(*args)


def pallas_linear(x, dense, act="none", residual=None, ln=None, out_dtype=jnp.float32):
    ln_g = ln["g"] if ln is not None else None
    ln_b = ln["b"] if ln is not None else None
    return _linear_impl(x, dense["w"], dense["b"], residual, ln_g, ln_b,
                        act=act, out_dtype=out_dtype)


def linear_nd(x, dense, act="none", residual=None, ln=None, out_dtype=jnp.float32):
    shp = x.shape
    N = dense["w"].shape[1]
    x2 = x.reshape(-1, shp[-1])
    r2 = residual.reshape(-1, N) if residual is not None else None
    out = pallas_linear(x2, dense, act=act, residual=r2, ln=ln, out_dtype=out_dtype)
    return out.reshape(*shp[:-1], N)


# ----------------------------- fused sum + LayerNorm -----------------------------

@jax.jit
def _add_ln_impl(xs, g, b):
    n_in = len(xs)
    M, D = xs[0].shape
    tm = _pick_tile(M, 512, 8)

    def kernel(*refs):
        o_ref = refs[-1]
        y = refs[0][...]
        for i in range(1, n_in):
            y = y + refs[i][...]
        mu = jnp.mean(y, axis=-1, keepdims=True)
        var = jnp.mean(jnp.square(y - mu), axis=-1, keepdims=True)
        o_ref[...] = (y - mu) * jax.lax.rsqrt(var + LN_EPS) * refs[n_in][...] + refs[n_in + 1][...]

    in_specs = [pl.BlockSpec((tm, D), lambda i: (i, 0)) for _ in range(n_in)]
    in_specs += [pl.BlockSpec((1, D), lambda i: (0, 0)),
                 pl.BlockSpec((1, D), lambda i: (0, 0))]
    return pl.pallas_call(
        kernel,
        out_shape=jax.ShapeDtypeStruct((M, D), jnp.float32),
        grid=(M // tm,),
        in_specs=in_specs,
        out_specs=pl.BlockSpec((tm, D), lambda i: (i, 0)),
        compiler_params=_cparams("parallel"),
    )(*xs, g, b)


def pallas_add_ln(x_list, ln):
    shp = x_list[0].shape
    D = shp[-1]
    xs = tuple(x.reshape(-1, D).astype(jnp.float32) for x in x_list)
    return _add_ln_impl(xs, ln["g"], ln["b"]).reshape(shp)


# ----------------------------- attention kernels (fused-head, lane-dense) -----------------------------

def _attn_out_kernel(*refs, scale, n_head, d_k, d_v, has_mask):
    q_ref, k_ref, v_ref = refs[0], refs[1], refs[2]
    o_ref = refs[-1]
    if has_mask:
        m = refs[3][0]                                        # (1 or tq, Lk) 0/1 f32
        neg = jnp.where(m > 0.0, 0.0, -1e9).astype(jnp.float32)
    for h in range(n_head):
        q = q_ref[0, :, h * d_k:(h + 1) * d_k]                # (tq, dk) bf16
        k = k_ref[0, :, h * d_k:(h + 1) * d_k]                # (Lk, dk)
        v = v_ref[0, :, h * d_v:(h + 1) * d_v]                # (Lk, dv)
        s = jax.lax.dot_general(q, k, (((1,), (1,)), ((), ())),
                                preferred_element_type=jnp.float32) * scale
        if has_mask:
            s = s + neg
        s = jnp.exp(s - jnp.max(s, axis=-1, keepdims=True))   # in-place exp: one f32 temporary
        p = s / jnp.sum(s, axis=-1, keepdims=True)            # exact reciprocal (softmax parity)
        ctx = jnp.dot(p.astype(jnp.bfloat16), v, preferred_element_type=jnp.float32)
        o_ref[0, :, h * d_v:(h + 1) * d_v] = ctx.astype(o_ref.dtype)


@functools.partial(jax.jit, static_argnames=("n_head", "d_k", "d_v"))
def pallas_attention_out(q, k, v, mask, n_head, d_k, d_v):
    """q:(B,Lq,H*dk) k:(B,Lk,H*dk) v:(B,Lk,H*dv) bf16; mask: None | (B,1,Lk) | (B,Lq,Lk) 0/1.
       Returns bf16 (B,Lq,H*dv) (lane-dense output, feeds the out-projection matmul)."""
    B, Lq, _ = q.shape
    Lk = k.shape[1]
    scale = 1.0 / math.sqrt(d_k)
    has_mask = mask is not None
    tq = _pick_tile(Lq, 256, 8)
    args = [q, k, v]
    in_specs = [pl.BlockSpec((1, tq, n_head * d_k), lambda b, i: (b, i, 0)),
                pl.BlockSpec((1, Lk, n_head * d_k), lambda b, i: (b, 0, 0)),
                pl.BlockSpec((1, Lk, n_head * d_v), lambda b, i: (b, 0, 0))]
    if has_mask:
        rows = mask.shape[1]
        args.append(mask.astype(jnp.float32))
        if rows == 1:
            in_specs.append(pl.BlockSpec((1, 1, Lk), lambda b, i: (b, 0, 0)))
        else:
            in_specs.append(pl.BlockSpec((1, tq, Lk), lambda b, i: (b, i, 0)))
    return pl.pallas_call(
        functools.partial(_attn_out_kernel, scale=scale, n_head=n_head,
                          d_k=d_k, d_v=d_v, has_mask=has_mask),
        out_shape=jax.ShapeDtypeStruct((B, Lq, n_head * d_v), jnp.bfloat16),
        grid=(B, Lq // tq),
        in_specs=in_specs,
        out_specs=pl.BlockSpec((1, tq, n_head * d_v), lambda b, i: (b, i, 0)),
        compiler_params=_cparams("parallel", "parallel"),
    )(*args)


def _attn_probs_mean_kernel(q_ref, k_ref, o_ref, *, scale, n_head, d_k):
    acc = None
    for h in range(n_head):
        q = q_ref[0, :, h * d_k:(h + 1) * d_k]
        k = k_ref[0, :, h * d_k:(h + 1) * d_k]
        s = jax.lax.dot_general(q, k, (((1,), (1,)), ((), ())),
                                preferred_element_type=jnp.float32) * scale
        s = jnp.exp(s - jnp.max(s, axis=-1, keepdims=True))
        p = s / jnp.sum(s, axis=-1, keepdims=True)
        acc = p if acc is None else acc + p
    o_ref[0] = acc * (1.0 / n_head)


@functools.partial(jax.jit, static_argnames=("n_head", "d_k"))
def pallas_attention_probs_mean(q, k, n_head, d_k):
    """q,k:(B,L,H*dk) bf16 -> head-mean softmax probs (B,L,L) f32 (semantic-attention path)."""
    B, L, _ = q.shape
    scale = 1.0 / math.sqrt(d_k)
    tq = _pick_tile(L, 256, 8)
    return pl.pallas_call(
        functools.partial(_attn_probs_mean_kernel, scale=scale, n_head=n_head, d_k=d_k),
        out_shape=jax.ShapeDtypeStruct((B, L, L), jnp.float32),
        grid=(B, L // tq),
        in_specs=[pl.BlockSpec((1, tq, n_head * d_k), lambda b, i: (b, i, 0)),
                  pl.BlockSpec((1, L, n_head * d_k), lambda b, i: (b, 0, 0))],
        out_specs=pl.BlockSpec((1, tq, L), lambda b, i: (b, i, 0)),
        compiler_params=_cparams("parallel", "parallel"),
    )(q, k)


# ----------------------------- GCN (all layers, whole batch, one launch) -----------------------------

def _gcn_kernel(*refs, nlayers):
    x_ref, adj_ref = refs[0], refs[1]
    o_ref = refs[-1]
    tb, L, _ = x_ref.shape
    adjn = adj_ref[...]                     # (tb,L,L) bf16, row-normalized + token-mask folded
    h = x_ref[...]
    for li in range(nlayers):
        w = refs[2 + 2 * li][...]           # (Din_i, Dout_i) bf16
        b = refs[3 + 2 * li][...]           # (1, Dout_i) f32
        din, dout = w.shape
        h2 = h.astype(jnp.bfloat16).reshape(tb * L, din)
        y = jnp.dot(h2, w, preferred_element_type=jnp.float32).reshape(tb, L, dout) + b
        # TODO(synk): adjacency matmul uses bf16 operands (f32 accumulate); torch keeps f32.
        y = jnp.einsum('bkl,blo->bko', adjn, y.astype(jnp.bfloat16),
                       preferred_element_type=jnp.float32)
        h = _gelu_exact(y)
    o_ref[...] = h


@jax.jit
def _gcn_impl(x, adj, mask, layers):
    nlayers = len(layers)
    B, L, Din = x.shape
    Dout = layers[-1]["w"].shape[1]
    # row-normalize + fold the token mask into the adjacency (zero rows -> zero outputs; gelu(0)=0)
    rs = jnp.sum(adj, axis=-1, keepdims=True)
    inv = jnp.where(rs == 0.0, 0.0, 1.0 / rs)
    adjn = (adj * inv * mask[:, :, None]).astype(jnp.bfloat16)
    xb = x.astype(jnp.bfloat16)

    per_item = L * L * 2 + L * Din * 2 + L * Dout * 4
    tb = _pick_tile(B, max(1, (8 << 20) // max(per_item, 1)), 1)

    args = [xb, adjn]
    in_specs = [pl.BlockSpec((tb, L, Din), lambda i: (i, 0, 0)),
                pl.BlockSpec((tb, L, L), lambda i: (i, 0, 0))]
    for layer in layers:
        args += [layer["w"], layer["b"]]
        in_specs += [pl.BlockSpec(layer["w"].shape, lambda i: (0, 0)),
                     pl.BlockSpec(layer["b"].shape, lambda i: (0, 0))]
    return pl.pallas_call(
        functools.partial(_gcn_kernel, nlayers=nlayers),
        out_shape=jax.ShapeDtypeStruct((B, L, Dout), jnp.float32),
        grid=(B // tb,),
        in_specs=in_specs,
        out_specs=pl.BlockSpec((tb, L, Dout), lambda i: (i, 0, 0)),
        compiler_params=_cparams("parallel"),
    )(*args)


def gcn_forward(layers, x, mask, adj):
    return _gcn_impl(x, adj, mask.astype(jnp.float32), tuple(layers))


# ----------------------------- RoPE biaffine scorer (batched, region-id select) -----------------------------

def _rope_biaffine_kernel(*refs, dual, n_class):
    n_qk = 8 if dual else 4
    rid = refs[n_qk][0]                      # (tq, L) int32 region ids: 0/1/2 thread regions, 3 pad
    o_ref = refs[-1]
    dn = (((1,), (1,)), ((), ()))
    for c in range(n_class):
        def logit3(qp_r, qn_r, kp_r, kn_r):
            qp = qp_r[0, c]                  # (tq, D) bf16
            qn = qn_r[0, c]
            kp = kp_r[0, c]                  # (L, D)
            kn = kn_r[0, c]
            l1 = jax.lax.dot_general(qp, kp, dn, preferred_element_type=jnp.float32)
            l2 = jax.lax.dot_general(qn, kp, dn, preferred_element_type=jnp.float32)
            l3 = jax.lax.dot_general(qp, kn, dn, preferred_element_type=jnp.float32)
            return l1, l2, l3

        l1, l2, l3 = logit3(refs[0], refs[1], refs[2], refs[3])
        if dual:
            u1, u2, u3 = logit3(refs[4], refs[5], refs[6], refs[7])
            l1, l2, l3 = l1 + u1, l2 + u2, l3 + u3
        out_c = jnp.where(rid == 0, l1,
                          jnp.where(rid == 1, l2,
                                    jnp.where(rid == 2, l3, 0.0)))
        o_ref[0, c] = out_c


@jax.jit
def _rope_biaffine_impl(tok, utt, rid):
    dual = utt is not None
    B, C, L, D = tok[0].shape
    tq = _pick_tile(L, 256, 8)
    args = list(tok) + (list(utt) if dual else []) + [rid]
    q_spec = pl.BlockSpec((1, C, tq, D), lambda b, i: (b, 0, i, 0))
    k_spec = pl.BlockSpec((1, C, L, D), lambda b, i: (b, 0, 0, 0))
    rid_spec = pl.BlockSpec((1, tq, L), lambda b, i: (b, i, 0))
    specs = []
    for _ in range(2 if dual else 1):
        specs += [q_spec, q_spec, k_spec, k_spec]       # (qp, qn, kp, kn)
    specs.append(rid_spec)
    return pl.pallas_call(
        functools.partial(_rope_biaffine_kernel, dual=dual, n_class=C),
        out_shape=jax.ShapeDtypeStruct((B, C, L, L), jnp.float32),
        grid=(B, L // tq),
        in_specs=specs,
        out_specs=pl.BlockSpec((1, C, tq, L), lambda b, i: (b, 0, i, 0)),
        compiler_params=_cparams("parallel", "parallel"),
    )(*args)


def pallas_rope_biaffine(tok, utt, region_ids):
    """tok/utt: tuples (qp, qn, kp, kn) of (B, L, C, D); returns logits (B, L, L, C)."""
    prep = lambda t: jnp.transpose(t, (0, 2, 1, 3)).astype(jnp.bfloat16)
    tok = tuple(prep(t) for t in tok)
    utt = tuple(prep(t) for t in utt) if utt is not None else None
    out = _rope_biaffine_impl(tok, utt, region_ids)      # (B, C, L, L): lane-dense kernel output
    return jnp.transpose(out, (0, 2, 3, 1))


def _plain_biaffine_kernel(q_ref, k_ref, o_ref):
    o_ref[0] = jnp.einsum('cmd,cnd->cmn', q_ref[0], k_ref[0],
                          preferred_element_type=jnp.float32)


@jax.jit
def pallas_plain_biaffine(q, k):
    """q,k: (B, L, C, D) -> logits (B, L, L, C) (non-RoPE path)."""
    qt = jnp.transpose(q, (0, 2, 1, 3)).astype(jnp.bfloat16)
    kt = jnp.transpose(k, (0, 2, 1, 3)).astype(jnp.bfloat16)
    B, C, L, D = qt.shape
    out = pl.pallas_call(
        _plain_biaffine_kernel,
        out_shape=jax.ShapeDtypeStruct((B, C, L, L), jnp.float32),
        grid=(B,),
        in_specs=[pl.BlockSpec((1, C, L, D), lambda b: (b, 0, 0, 0)),
                  pl.BlockSpec((1, C, L, D), lambda b: (b, 0, 0, 0))],
        out_specs=pl.BlockSpec((1, C, L, L), lambda b: (b, 0, 0, 0)),
        compiler_params=_cparams("parallel"),
    )(qt, kt)
    return jnp.transpose(out, (0, 2, 3, 1))


# ----------------------------- attention glue (fused QKV, fused out-proj+res+LN) -----------------------------

def mha_block(p, q_in, kv_in, mask, residual, ln):
    """Multi-head attention returning the projected output with fused residual + LayerNorm."""
    H, dk, dv = p["n_head"], p["d_k"], p["d_v"]
    qd = H * dk
    kd = H * dk
    if q_in is kv_in:                                   # self-attention: one fused QKV matmul
        qkv = linear_nd(q_in, p["qkv"], out_dtype=jnp.bfloat16)
        q = qkv[..., :qd]
        k = qkv[..., qd:qd + kd]
        v = qkv[..., qd + kd:]
    else:                                               # cross-attention: Q and fused KV matmuls
        q = linear_nd(q_in, p["q"], out_dtype=jnp.bfloat16)
        kv = linear_nd(kv_in, p["kv"], out_dtype=jnp.bfloat16)
        k = kv[..., :kd]
        v = kv[..., kd:]
    ctx = pallas_attention_out(q, k, v, mask, n_head=H, d_k=dk, d_v=dv)   # (B, Lq, H*dv) bf16
    return linear_nd(ctx, p["o"], residual=residual, ln=ln)


def mha_probs_mean(p, x):
    """Semantic attention path: only head-mean softmax probs are needed (no V, no context)."""
    H, dk = p["n_head"], p["d_k"]
    qd = H * dk
    qk = linear_nd(x, p["qk"], out_dtype=jnp.bfloat16)
    q = qk[..., :qd]
    k = qk[..., qd:]
    return pallas_attention_probs_mean(q, k, n_head=H, d_k=dk)


# ----------------------------- module-level glue -----------------------------

def bert_encoder(p, input_ids, segment_ids, attn_mask):
    # TODO(synk): stands in for AutoModel.from_pretrained(config.bert_path)
    T, Lt = input_ids.shape
    emb = p["word_emb"][input_ids] + p["pos_emb"][None, :Lt, :] + p["seg_emb"][segment_ids]
    h = pallas_add_ln([emb], p["emb_ln"])
    key_mask = attn_mask.astype(jnp.float32)[:, None, :]         # (T,1,Lt) 0/1; select in-kernel
    h = mha_block(p["attn"], h, h, key_mask, residual=h, ln=p["attn_ln"])
    ff = linear_nd(h, p["ffn1"], act="gelu", out_dtype=jnp.bfloat16)
    h = linear_nd(ff, p["ffn2"], residual=h, ln=p["ffn_ln"])
    return h


def interact_layer(p, x, global_x, thread_masks):
    mask = thread_masks.astype(jnp.float32)                      # (B, Lq, Lk) 0/1
    x = mha_block(p["attn"], x, global_x, mask, residual=x, ln=p["ln_pre"])
    h = linear_nd(x, p["ffn1"], act="gelu", out_dtype=jnp.bfloat16)
    x = linear_nd(h, p["ffn2"], residual=x, ln=p["ln_post"])
    return x  # trailing dropout = identity


# ----------------------------- ragged glue: precomputed gather / scatter indices -----------------------------

def build_merge_indices(thread_token_lens, dialogue_length, max_len):
    ends = list(accumulate(dialogue_length))
    starts = [e - d for e, d in zip(ends, dialogue_length)]
    B = len(dialogue_length)
    row_idx = np.zeros((B, max_len), np.int32)
    tok_idx = np.zeros((B, max_len), np.int32)
    valid = np.zeros((B, max_len, 1), np.float32)
    for i, (s, e) in enumerate(zip(starts, ends)):
        pos = 0
        for j in range(s, e):
            n = int(thread_token_lens[j])
            row_idx[i, pos:pos + n] = j
            tok_idx[i, pos:pos + n] = np.arange(n)
            valid[i, pos:pos + n, 0] = 1.0
            pos += n
    return jnp.asarray(row_idx), jnp.asarray(tok_idx), jnp.asarray(valid)


@jax.jit
def _merge_gather(x, row_idx, tok_idx, valid):
    return x[row_idx, tok_idx] * valid


def merge_sentence(x, merge_idx):
    return _merge_gather(x, *merge_idx)


def build_topk_indices(sent_spans, topk_ratio, U):
    flat = [(b, u, s, e) for b, spans in enumerate(sent_spans) for u, (s, e) in enumerate(spans)]
    S = len(flat)
    B = len(sent_spans)
    max_tok = max(e - s - 1 for (_, _, s, e) in flat)
    tok_b = np.zeros((S, max_tok), np.int32)
    tok_p = np.zeros((S, max_tok), np.int32)
    tok_valid = np.zeros((S, max_tok), np.float32)
    spk_b = np.zeros((S,), np.int32)
    spk_p = np.zeros((S,), np.int32)
    out_b = np.zeros((S,), np.int32)
    out_u = np.zeros((S,), np.int32)
    inv_len = np.zeros((S, 1), np.float32)
    k_int = np.zeros((S,), np.int32)
    for n, (b, u, s, e) in enumerate(flat):
        nt = e - s - 1
        tok_b[n, :] = b
        tok_p[n, :nt] = np.arange(s, e - 1)
        tok_p[n, nt:] = s
        tok_valid[n, :nt] = 1.0
        spk_b[n] = b
        spk_p[n] = e - 1
        out_b[n] = b
        out_u[n] = u
        inv_len[n, 0] = 1.0 / float(nt)
        k = int(topk_ratio * (e - s))
        k_int[n] = k if k > 0 else 1
    k_max = int(k_int.max())
    return dict(tok_b=jnp.asarray(tok_b), tok_p=jnp.asarray(tok_p),
                tok_valid=jnp.asarray(tok_valid),
                spk_b=jnp.asarray(spk_b), spk_p=jnp.asarray(spk_p),
                out_b=jnp.asarray(out_b), out_u=jnp.asarray(out_u),
                inv_len=jnp.asarray(inv_len),
                k_div=jnp.asarray(k_int.astype(np.float32)),
                kmask=jnp.asarray(np.arange(k_max)[None, :] < k_int[:, None]),
                k_max=k_max, B=B, U=U)


@functools.partial(jax.jit, static_argnames=("k_max",))
def _topk_core(sentence_seq, scores_all, tok_b, tok_p, tok_valid,
               spk_b, spk_p, inv_len, kmask, k_div, k_max):
    tok = sentence_seq[tok_b, tok_p]                              # (S, max_tok, Dh)
    spk = sentence_seq[spk_b, spk_p]                              # (S, Dh)
    sc = scores_all[tok_b, tok_p] * inv_len                       # (S, max_tok)
    sc = jnp.where(tok_valid > 0, sc, -jnp.inf)
    vals, idx = jax.lax.top_k(sc, k_max)                          # (S, k_max)
    vals = jnp.where(kmask, vals, -jnp.inf)
    w = jax.nn.softmax(vals, axis=-1)
    S = tok.shape[0]
    sel = tok[jnp.arange(S)[:, None], idx] * w[..., None]         # (S, k_max, Dh)
    mean_part = jnp.sum(sel, axis=1) / k_div[:, None]
    max_part = jnp.max(jnp.where(kmask[..., None], sel, -jnp.inf), axis=1)
    return jnp.concatenate([mean_part, max_part, spk], axis=-1)   # (S, 3*Dh)


def topk_aggregate(params, tk, sentence_seq):
    """Batched score linear + batched top-k gather + batched utt linear (no Python loops)."""
    B, L, Dh = sentence_seq.shape
    scores_all = pallas_linear(sentence_seq.reshape(B * L, Dh), params["topk"]).reshape(B, L)
    feats = _topk_core(sentence_seq, scores_all, tk["tok_b"], tk["tok_p"], tk["tok_valid"],
                       tk["spk_b"], tk["spk_p"], tk["inv_len"], tk["kmask"], tk["k_div"],
                       k_max=tk["k_max"])
    utt_flat = pallas_linear(feats, params["utt"])
    out = jnp.zeros((tk["B"], tk["U"], Dh), jnp.float32).at[tk["out_b"], tk["out_u"]].set(utt_flat)
    return out


# ----------------------------- RoPE helpers & region ids -----------------------------

def _rope_pair(x, pos_idx, pos_type):
    """x: (B, L, C, D); returns rotated versions with +pos and -pos phases."""
    D = INNER_DIM
    half = D // 2
    idx = jnp.arange(half, dtype=jnp.float32)
    base = 10000.0 if pos_type == 0 else 15.0
    freqs = jnp.power(base, -2.0 * idx / D)
    ang = pos_idx.astype(jnp.float32)[..., None] * freqs                 # (B, L, half)
    cos = jnp.repeat(jnp.cos(ang), 2, axis=-1)[:, :, None, :]            # (B, L, 1, D)
    sin = jnp.repeat(jnp.sin(ang), 2, axis=-1)[:, :, None, :]
    x2 = jnp.stack([-x[..., 1::2], x[..., 0::2]], axis=-1).reshape(x.shape)
    xp = x * cos + x2 * sin
    xn = x * cos - x2 * sin
    return xp, xn


def build_region_ids(thread_lengths, L):
    """Per-dialogue (L,L) region id: 0 -> no flip, 1 -> q uses -pos, 2 -> k uses -pos, 3 -> padding."""
    B = len(thread_lengths)
    rid = np.full((B, L, L), 3, np.int32)
    for b, tl in enumerate(thread_lengths):
        accu = [0] + list(accumulate(tl))
        nt = len(tl)
        for i in range(nt):
            for j in range(nt):
                rs, re = accu[i], accu[i + 1]
                cs, ce = accu[j], accu[j + 1]
                if 0 < i < j:
                    v = 1
                elif 0 < j < i:
                    v = 2
                else:
                    v = 0
                rid[b, rs:re, cs:ce] = v
    return jnp.asarray(rid)


def weighted_cross_entropy(logits, labels, class_weights, mask):
    C = logits.shape[-1]
    logits2 = logits.reshape(-1, C)
    labels1 = labels.reshape(-1)
    m = mask.reshape(-1).astype(jnp.float32)
    logp = jax.nn.log_softmax(logits2, axis=-1)
    picked = jnp.take_along_axis(logp, labels1[:, None], axis=-1)[:, 0]
    w = class_weights[labels1] * m
    return -(w * picked).sum() / jnp.maximum(w.sum(), 1e-12)


def classify_matrix(cfg, meta, region_ids, seq_out, labels, masks, name):
    B, L, D = seq_out.shape
    inner = INNER_DIM
    C = D // (inner * 4)
    outs = seq_out.reshape(B, L, C, inner * 4)            # split(inner*4, -1) + stack(-2)
    q_token = outs[..., :inner]
    q_utt = outs[..., inner: 2 * inner]
    k_token = outs[..., 2 * inner: 3 * inner]
    k_utt = outs[..., 3 * inner:]
    if cfg["use_rope"]:
        qp_t, qn_t = _rope_pair(q_token, meta["token_index"], 0)
        kp_t, kn_t = _rope_pair(k_token, meta["token_index"], 0)
        if name == "ent":
            logits = pallas_rope_biaffine((qp_t, qn_t, kp_t, kn_t), None, region_ids)
        else:
            qp_u, qn_u = _rope_pair(q_utt, meta["utterance_index"], 1)
            kp_u, kn_u = _rope_pair(k_utt, meta["utterance_index"], 1)
            logits = pallas_rope_biaffine((qp_t, qn_t, kp_t, kn_t),
                                          (qp_u, qn_u, kp_u, kn_u), region_ids)
    else:
        logits = pallas_plain_biaffine(q_token, k_token)
    cw = jnp.array([1.0] + [float(cfg["loss_weight"][name])] * (C - 1), jnp.float32)
    loss = weighted_cross_entropy(logits, labels, cw, masks)
    return loss, logits


# ----------------------------- full forward -----------------------------

def bert_word_pair_forward(params, cfg, meta, inputs):
    seq_out = bert_encoder(params["bert"], inputs["merged_input_ids"],
                           inputs["merged_input_segments"], inputs["merged_input_masks"])

    merge_idx = build_merge_indices(meta["thread_token_lens"],
                                    meta["merged_dialog_length"], meta["L"])
    sent_seq = merge_sentence(seq_out, merge_idx)                              # root_merge == 0

    syn = gcn_forward(params["syngcn"], seq_out, inputs["merged_input_masks"],
                      inputs["adj_matrixes"])
    syn = merge_sentence(syn, merge_idx)

    semantic_adj = mha_probs_mean(params["semantic_attn"], seq_out)            # (T, Lt, Lt)
    sem = gcn_forward(params["semgcn"], seq_out, inputs["merged_input_masks"], semantic_adj)
    sem = merge_sentence(sem, merge_idx)

    x = pallas_add_ln([sent_seq, syn, sem], params["ln"])

    # global encoding (global_masks consumed via static sent_spans metadata)
    U = inputs["utterance_level_mask"].shape[1]
    tk_idx = build_topk_indices(meta["sent_spans"], cfg["topk"], U)
    utt_seq = topk_aggregate(params, tk_idx, sent_seq)
    g = gcn_forward(params["dscgcn"], utt_seq, inputs["utterance_level_mask"],
                    inputs["utterance_level_reply_adj"])
    global_out = pallas_add_ln([utt_seq, g], params["global_ln"])

    x = interact_layer(params["interact"], x, global_out, inputs["thread_masks"])

    x = linear_nd(x, params["dense_all"])
    ent_dim = INNER_DIM * 4 * 4
    rel_dim = INNER_DIM * 4 * 3
    seq_ent = x[:, :, :ent_dim]
    seq_rel = x[:, :, ent_dim:ent_dim + rel_dim]
    seq_pol = x[:, :, ent_dim + rel_dim:]

    region_ids = build_region_ids(meta["thread_lengths"], meta["L"])

    ent_loss, ent_logit = classify_matrix(cfg, meta, region_ids, seq_ent,
                                          inputs["ent_matrix"], inputs["sentence_masks"], "ent")
    rel_loss, rel_logit = classify_matrix(cfg, meta, region_ids, seq_rel,
                                          inputs["rel_matrix"], inputs["full_masks"], "rel")
    pol_loss, pol_logit = classify_matrix(cfg, meta, region_ids, seq_pol,
                                          inputs["pol_matrix"], inputs["full_masks"], "pol")
    total = ent_loss + rel_loss + pol_loss
    return total, [ent_loss, rel_loss, pol_loss], (ent_logit, rel_logit, pol_logit)


# ----------------------------- parameter init (kernel-ready weights) -----------------------------

def init_attention(key, n_head, d_model, d_k, d_v):
    ks = jax.random.split(key, 4)
    dq = make_dense(ks[0], d_model, n_head * d_k)
    dk_ = make_dense(ks[1], d_model, n_head * d_k)
    dv_ = make_dense(ks[2], d_model, n_head * d_v)
    do = make_dense(ks[3], n_head * d_v, d_model)
    qd = n_head * d_k
    w_qkv = jnp.concatenate([dq["w"], dk_["w"], dv_["w"]], axis=1)
    b_qkv = jnp.concatenate([dq["b"], dk_["b"], dv_["b"]], axis=1)
    return {"qkv": {"w": w_qkv, "b": b_qkv},
            "q": dq,
            "kv": {"w": w_qkv[:, qd:], "b": b_qkv[:, qd:]},
            "qk": {"w": w_qkv[:, :2 * qd], "b": b_qkv[:, :2 * qd]},
            "o": do,
            "n_head": n_head, "d_k": d_k, "d_v": d_v}


def init_params(key, bh, nhead, head_size, vocab, max_pos):
    keys = jax.random.split(key, 32)
    it = iter(keys)
    params = {}

    bert = {
        "word_emb": 0.02 * jax.random.normal(next(it), (vocab, bh), jnp.float32),
        "pos_emb": 0.02 * jax.random.normal(next(it), (max_pos, bh), jnp.float32),
        "seg_emb": 0.02 * jax.random.normal(next(it), (2, bh), jnp.float32),
        "emb_ln": make_ln(bh),
        "attn": init_attention(next(it), nhead, bh, head_size, head_size),
        "attn_ln": make_ln(bh),
        "ffn1": make_dense(next(it), bh, 4 * bh),
        "ffn2": make_dense(next(it), 4 * bh, bh),
        "ffn_ln": make_ln(bh),
    }
    params["bert"] = bert

    all_dim = INNER_DIM * 4 * 4 + INNER_DIM * 4 * 3 + INNER_DIM * 4 * 4
    params["dense_all"] = make_dense(next(it), bh, all_dim)

    params["interact"] = {
        "attn": init_attention(next(it), nhead, bh, head_size, head_size),
        "ln_pre": make_ln(bh), "ln_post": make_ln(bh),
        "ffn1": make_dense(next(it), bh, 4 * bh),
        "ffn2": make_dense(next(it), 4 * bh, bh),
    }

    params["ln"] = make_ln(bh)
    params["syngcn"] = tuple(make_dense(next(it), bh, bh) for _ in range(2))
    params["semgcn"] = tuple(make_dense(next(it), bh, bh) for _ in range(2))
    params["semantic_attn"] = init_attention(next(it), nhead, bh, head_size, head_size)
    params["topk"] = make_dense(next(it), bh, 1)
    params["utt"] = make_dense(next(it), 3 * bh, bh)
    params["dscgcn"] = tuple(make_dense(next(it), bh, bh) for _ in range(2))
    params["global_ln"] = make_ln(bh)
    return params


# ----------------------------- driver -----------------------------

if __name__ == "__main__":
    bh, nhead = 64, 4
    head_size = bh // nhead
    vocab, max_pos = 50, 32

    B = 2          # dialogues
    T = 4          # merged thread rows (2 per dialogue)
    Tl = 10        # padded tokens per thread row
    L = 12         # merged dialogue length
    U = 3          # utterances per dialogue

    meta = {
        "merged_dialog_length": [2, 2],
        "thread_token_lens": [6, 6, 6, 6],
        "thread_lengths": [[6, 6], [6, 6]],
        "L": L,
        "sent_spans": [[(0, 4), (4, 8), (8, 12)], [(0, 4), (4, 8), (8, 12)]],
        "token_index": jnp.array([[0, 1, 2, 3, 4, 5, 0, 1, 2, 3, 4, 5]] * B, jnp.int32),
        "utterance_index": jnp.array([[0] * 4 + [1] * 4 + [2] * 4] * B, jnp.int32),
    }
    cfg = {"use_rope": True, "topk": 0.5,
           "loss_weight": {"ent": 1, "rel": 2, "pol": 2}}

    key = jax.random.PRNGKey(0)
    kp, ki = jax.random.split(key)
    params = init_params(kp, bh, nhead, head_size, vocab, max_pos)

    k_ids, k_adj, k_ent, k_rel, k_pol = jax.random.split(ki, 5)
    merged_input_ids = jax.random.randint(k_ids, (T, Tl), 1, vocab)
    merged_input_masks = (jnp.arange(Tl)[None, :]
                          < jnp.array(meta["thread_token_lens"])[:, None]).astype(jnp.float32)
    merged_input_segments = jnp.zeros((T, Tl), jnp.int32)
    adj_matrixes = jnp.clip(
        (jax.random.uniform(k_adj, (T, Tl, Tl)) < 0.3).astype(jnp.float32) + jnp.eye(Tl)[None],
        0.0, 1.0)

    own_utt = jax.nn.one_hot(meta["utterance_index"], U)
    root_utt = jnp.zeros((B, L, U)).at[:, :, 0].set(1.0)
    thread_masks = jnp.maximum(own_utt, root_utt).astype(jnp.int32)

    inputs = {
        "merged_input_ids": merged_input_ids,
        "merged_input_masks": merged_input_masks,
        "merged_input_segments": merged_input_segments,
        "adj_matrixes": adj_matrixes,
        "thread_masks": thread_masks,
        "utterance_level_reply_adj": jnp.broadcast_to(
            jnp.array([[1., 0., 0.], [1., 1., 0.], [0., 1., 1.]]), (B, U, U)),
        "utterance_level_mask": jnp.ones((B, U), jnp.float32),
        "sentence_masks": jnp.ones((B, L, L), jnp.int32),
        "full_masks": jnp.ones((B, L, L), jnp.int32),
        "ent_matrix": jax.random.randint(k_ent, (B, L, L), 0, 4),
        "rel_matrix": jax.random.randint(k_rel, (B, L, L), 0, 3),
        "pol_matrix": jax.random.randint(k_pol, (B, L, L), 0, 4),
    }

    total_loss, losses, logits = bert_word_pair_forward(params, cfg, meta, inputs)
    jax.block_until_ready(total_loss)
    for lg in logits:
        jax.block_until_ready(lg)
    print("KERNEL_OK")
</pallas_src>

<mosaic_0001>
module attributes {stable_mosaic.version = 11 : i64} {
  func.func @kernel(%arg0: i32, %arg1: memref<40x64xf32, #tpu.memory_space<vmem>>, %arg2: memref<1x64xf32, #tpu.memory_space<vmem>>, %arg3: memref<1x64xf32, #tpu.memory_space<vmem>>, %arg4: memref<40x64xf32, #tpu.memory_space<vmem>>) attributes {dimension_semantics = [#tpu.dimension_semantics<parallel>], iteration_bounds = array<i64: 1>, scalar_prefetch = 0 : i64, scratch_operands = 0 : i64, tpu.core_type = #tpu.core_type<tc>, window_params = [{transform_indices = @transform_0, window_bounds = array<i64: 40, 64>}, {pipeline_mode = #tpu.pipeline_mode<synchronous>, transform_indices = @transform_1, window_bounds = array<i64: 1, 64>}, {pipeline_mode = #tpu.pipeline_mode<synchronous>, transform_indices = @transform_2, window_bounds = array<i64: 1, 64>}, {transform_indices = @transform_3, window_bounds = array<i64: 40, 64>}]} {
    %c0 = arith.constant 0 : index
    %c0_0 = arith.constant 0 : index
    %0 = vector.load %arg1[%c0, %c0_0] : memref<40x64xf32, #tpu.memory_space<vmem>>, vector<40x64xf32>
    %cst = arith.constant dense<0.000000e+00> : vector<40xf32>
    %1 = vector.multi_reduction <add>, %0, %cst [1] : vector<40x64xf32> to vector<40xf32>
    %2 = vector.shape_cast %1 : vector<40xf32> to vector<40x1xf32>
    %cst_1 = arith.constant 6.400000e+01 : f32
    %3 = vector.broadcast %cst_1 : f32 to vector<40x1xf32>
    %4 = arith.divf %2, %3 : vector<40x1xf32>
    %5 = vector.broadcast %4 : vector<40x1xf32> to vector<40x64xf32>
    %6 = arith.subf %0, %5 : vector<40x64xf32>
    %7 = arith.mulf %6, %6 : vector<40x64xf32>
    %cst_2 = arith.constant dense<0.000000e+00> : vector<40xf32>
    %8 = vector.multi_reduction <add>, %7, %cst_2 [1] : vector<40x64xf32> to vector<40xf32>
    %9 = vector.shape_cast %8 : vector<40xf32> to vector<40x1xf32>
    %cst_3 = arith.constant 6.400000e+01 : f32
    %10 = vector.broadcast %cst_3 : f32 to vector<40x1xf32>
    %11 = arith.divf %9, %10 : vector<40x1xf32>
    %12 = vector.broadcast %4 : vector<40x1xf32> to vector<40x64xf32>
    %13 = arith.subf %0, %12 : vector<40x64xf32>
    %cst_4 = arith.constant 9.99999996E-13 : f32
    %14 = vector.broadcast %cst_4 : f32 to vector<40x1xf32>
    %15 = arith.addf %11, %14 : vector<40x1xf32>
    %16 = math.rsqrt %15 : vector<40x1xf32>
    %17 = vector.broadcast %16 : vector<40x1xf32> to vector<40x64xf32>
    %18 = arith.mulf %13, %17 : vector<40x64xf32>
    %c0_5 = arith.constant 0 : index
    %c0_6 = arith.constant 0 : index
    %19 = vector.load %arg2[%c0_5, %c0_6] : memref<1x64xf32, #tpu.memory_space<vmem>>, vector<1x64xf32>
    %20 = vector.broadcast %19 : vector<1x64xf32> to vector<40x64xf32>
    %21 = arith.mulf %18, %20 : vector<40x64xf32>
    %c0_7 = arith.constant 0 : index
    %c0_8 = arith.constant 0 : index
    %22 = vector.load %arg3[%c0_7, %c0_8] : memref<1x64xf32, #tpu.memory_space<vmem>>, vector<1x64xf32>
    %23 = vector.broadcast %22 : vector<1x64xf32> to vector<40x64xf32>
    %24 = arith.addf %21, %23 : vector<40x64xf32>
    %c0_9 = arith.constant 0 : index
    %c0_10 = arith.constant 0 : index
    %25 = vector.load %arg4[%c0_9, %c0_10] : memref<40x64xf32, #tpu.memory_space<vmem>>, vector<40x64xf32>
    tpu.vector_store %arg4[%c0_9, %c0_10], %24 {strides = array<i32>} : memref<40x64xf32, #tpu.memory_space<vmem>>, vector<40x64xf32>,
    return
  }
  func.func @transform_0(%arg0: i32) -> (i32, i32) {
    %c0_i32 = arith.constant 0 : i32
    %c0_i32_0 = arith.constant 0 : i32
    return %arg0, %c0_i32 : i32, i32
  }
  func.func @transform_1(%arg0: i32) -> (i32, i32) {
    %c0_i32 = arith.constant 0 : i32
    %c0_i32_0 = arith.constant 0 : i32
    %c0_i32_1 = arith.constant 0 : i32
    return %c0_i32, %c0_i32_0 : i32, i32
  }
  func.func @transform_2(%arg0: i32) -> (i32, i32) {
    %c0_i32 = arith.constant 0 : i32
    %c0_i32_0 = arith.constant 0 : i32
    %c0_i32_1 = arith.constant 0 : i32
    return %c0_i32, %c0_i32_0 : i32, i32
  }
  func.func @transform_3(%arg0: i32) -> (i32, i32) {
    %c0_i32 = arith.constant 0 : i32
    %c0_i32_0 = arith.constant 0 : i32
    return %arg0, %c0_i32 : i32, i32
  }
}

</mosaic_0001>

<llo_original>
// kernel: _add_ln_impl.1
$region0: #{_add_ln_impl.1}
  #allocation0 [shape = 'u32[]', space=smem, size = 0x4, offset = 0x4, fixed_abs, tag = 'smem constant byte address 0x4 - core index']
  #allocation1 [shape = 'u32[144,128]{1,0:T(1,128)}', space=vmem, size = 0x12000, scoped, tag = 'internal scratch']
  %s0 = inlined_call_operand.hbm [shape: f32[40,64], index: 0, kind: input, shape index: {}]
  %s1 = inlined_call_operand.vmem [shape: f32[1,64], index: 1, kind: input, shape index: {}]
  %s2 = inlined_call_operand.vmem [shape: f32[1,64], index: 2, kind: input, shape index: {}]
  %s3 = inlined_call_operand.hbm [shape: f32[40,64], index: 3, kind: output, shape index: {}]
  %s4 = sld [smem:[#allocation0]]
  $region26: #{_add_ln_impl.1} parent=0
    _
  %s6 = ssub.s32 1, %s4
  %s7 = scalar_select 0, %s6, %s4
  $region1: #{_add_ln_impl.1} parent=0
    #allocation2 [shape = 'u8[20480]{0}', space=vmem, size = 0x5000, scoped, tag = 'input window, operand 0, single buffered']
    #allocation3 [shape = 's32[1]{0}', space=sflag, size = 0x4, scoped, tag = 'scoped memory for _add_ln_impl.1']
    #allocation4 [shape = 's32[1]{0}', space=sflag, size = 0x4, scoped, tag = 'scoped memory for _add_ln_impl.1']
    #allocation5 [shape = 'u8[20480]{0}', space=vmem, size = 0x5000, scoped, tag = 'output window, operand 0, single buffered']
    %8 = vsyncpa [#allocation3], 0
    %9 = vsyncpa [#allocation4], 0
    // Predicated region
    $region2: #{_add_ln_impl.1} parent=1 // pred_check
      _
    $region3: #{_add_ln_impl.1} parent=1 // pred_check_branch
      %11 = sbr.rel (0) target = $region5
    $region4: #{_add_ln_impl.1} parent=1 // pred_region
      %s13 = ssub.s32 640, 640
      %14 = vsyncadd [#allocation3], %s13
      %s15 = sshll.u32 [#allocation2], 4
      %s16 = int_to_ptr.vmem [resolvable:$true] %s15
      %21 = dma.hbm_to_vmem [thread:$0]  %s0, 640, %s16, [#allocation3], 128, 128, 8
    $region5: #{_add_ln_impl.1} parent=1 // pred_fallthru
      _
    // Predicated region
    $region6: #{_add_ln_impl.1} parent=1 // pred_check
      _
    $region7: #{_add_ln_impl.1} parent=1 // pred_check_branch
      %23 = sbr.rel (0) target = $region9
    $region8: #{_add_ln_impl.1} parent=1 // pred_region
      _
    $region9: #{_add_ln_impl.1} parent=1 // pred_fallthru
      _
    // Predicated region
    $region10: #{_add_ln_impl.1} parent=1 // pred_check
      _
    $region11: #{_add_ln_impl.1} parent=1 // pred_check_branch
      %25 = sbr.rel (0) target = $region13
    $region12: #{_add_ln_impl.1} parent=1 // pred_region
      _
    $region13: #{_add_ln_impl.1} parent=1 // pred_fallthru
      _
    // Predicated region
    $region14: #{_add_ln_impl.1} parent=1 // pred_check
      _
    $region15: #{_add_ln_impl.1} parent=1 // pred_check_branch
      %27 = sbr.rel (0) target = $region17
    $region16: #{_add_ln_impl.1} parent=1 // pred_region
      %28 = dma.done [#allocation3], 640
    $region17: #{_add_ln_impl.1} parent=1 // pred_fallthru
      _
    %v29 = vld [vmem:[#allocation2] sm:$0xff]
    %v30 = vld [vmem:[#allocation2 + $0x8] sm:$0xff]
    %v31 = vld [vmem:[#allocation2 + $0x10] sm:$0xff]
    %v32 = vld [vmem:[#allocation2 + $0x18] sm:$0xff]
    %v33 = vld [vmem:[#allocation2 + $0x20] sm:$0xff]
    %vm34 = vcmask 523264
    %v35 = vsel %vm34, %v29, 0.0
    %36 = vadd.xlane.f32.xlu0 %v35
    %v37 = vpop.xlane.xlu0 %36
    %v38 = vsel %vm34, %v30, 0.0
    %39 = vadd.xlane.f32.xlu0 %v38
    %v40 = vpop.xlane.xlu0 %39
    %v41 = vsel %vm34, %v31, 0.0
    %42 = vadd.xlane.f32.xlu0 %v41
    %v43 = vpop.xlane.xlu0 %42
    %v44 = vsel %vm34, %v32, 0.0
    %45 = vadd.xlane.f32.xlu0 %v44
    %v46 = vpop.xlane.xlu0 %45
    %v47 = vsel %vm34, %v33, 0.0
    %48 = vadd.xlane.f32.xlu0 %v47
    %v49 = vpop.xlane.xlu0 %48
    %v50 = vrcp.pop 64.0
    %v51 = vmul.f32 %v37, %v50
    %v52 = vmul.f32 %v40, %v50
    %v53 = vmul.f32 %v43, %v50
    %v54 = vmul.f32 %v46, %v50
    %v55 = vmul.f32 %v49, %v50
    %v56 = vsub.f32 %v29, %v51
    %v57 = vsub.f32 %v30, %v52
    %v58 = vsub.f32 %v31, %v53
    %v59 = vsub.f32 %v32, %v54
    %v60 = vsub.f32 %v33, %v55
    %v61 = vmul.f32 %v56, %v56
    %v62 = vmul.f32 %v57, %v57
    %v63 = vmul.f32 %v58, %v58
    %v64 = vmul.f32 %v59, %v59
    %v65 = vmul.f32 %v60, %v60
    %v66 = vsel %vm34, %v61, 0.0
    %67 = vadd.xlane.f32.xlu0 %v66
    %v68 = vpop.xlane.xlu0 %67
    %v69 = vsel %vm34, %v62, 0.0
    %70 = vadd.xlane.f32.xlu0 %v69
    %v71 = vpop.xlane.xlu0 %70
    %v72 = vsel %vm34, %v63, 0.0
    %73 = vadd.xlane.f32.xlu0 %v72
    %v74 = vpop.xlane.xlu0 %73
    %v75 = vsel %vm34, %v64, 0.0
    %76 = vadd.xlane.f32.xlu0 %v75
    %v77 = vpop.xlane.xlu0 %76
    %v78 = vsel %vm34, %v65, 0.0
    %79 = vadd.xlane.f32.xlu0 %v78
    %v80 = vpop.xlane.xlu0 %79
    %v81 = vmul.f32 %v68, %v50
    %v82 = vmul.f32 %v71, %v50
    %v83 = vmul.f32 %v74, %v50
    %v84 = vmul.f32 %v77, %v50
    %v85 = vmul.f32 %v80, %v50
    %v86 = vadd.f32 %v81, 1e-12
    %v87 = vadd.f32 %v82, 1e-12
    %v88 = vadd.f32 %v83, 1e-12
    %v89 = vadd.f32 %v84, 1e-12
    %v90 = vadd.f32 %v85, 1e-12
    %v91 = vrsqrt.pop %v86
    %v92 = vrsqrt.pop %v87
    %v93 = vrsqrt.pop %v88
    %v94 = vrsqrt.pop %v89
    %v95 = vrsqrt.pop %v90
    %v96 = vmul.f32 %v56, %v91
    %v97 = vmul.f32 %v57, %v92
    %v98 = vmul.f32 %v58, %v93
    %v99 = vmul.f32 %v59, %v94
    %v100 = vmul.f32 %v60, %v95
    %v101 = vld [vmem:[%s1] sm:$0x1]
    %v103 = vlaneseq
    %v104 = vshrl.u32 %v103, 7
    %v105 = vsub.s32 0, %v104
    %v106 = vrot.slane %v101, %v105
    %v108 = vmul.f32 %v96, %v106
    %v109 = vmul.f32 %v97, %v106
    %v110 = vmul.f32 %v98, %v106
    %v111 = vmul.f32 %v99, %v106
    %v112 = vmul.f32 %v100, %v106
    %v113 = vld [vmem:[%s2] sm:$0x1]
    %v115 = vlaneseq
    %v116 = vshrl.u32 %v115, 7
    %v117 = vsub.s32 0, %v116
    %v118 = vrot.slane %v113, %v117
    %v120 = vadd.f32 %v108, %v118
    %v121 = vadd.f32 %v109, %v118
    %v122 = vadd.f32 %v110, %v118
    %v123 = vadd.f32 %v111, %v118
    %v124 = vadd.f32 %v112, %v118
    %125 = vst.msk [vmem:[#allocation5] sm:$0xff] %vm34, %v120
    %126 = vst.msk [vmem:[#allocation5 + $0x8] sm:$0xff] %vm34, %v121
    %127 = vst.msk [vmem:[#allocation5 + $0x10] sm:$0xff] %vm34, %v122
    %128 = vst.msk [vmem:[#allocation5 + $0x18] sm:$0xff] %vm34, %v123
    %129 = vst.msk [vmem:[#allocation5 + $0x20] sm:$0xff] %vm34, %v124
    // Predicated region
    $region18: #{_add_ln_impl.1} parent=1 // pred_check
      _
    $region19: #{_add_ln_impl.1} parent=1 // pred_check_branch
      %131 = sbr.rel (0) target = $region21
    $region20: #{_add_ln_impl.1} parent=1 // pred_region
      %s133 = ssub.s32 640, 640
      %134 = vsyncadd [#allocation4], %s133
      %s135 = sshll.u32 [#allocation5], 4
      %s136 = int_to_ptr.vmem [resolvable:$true] %s135
      %141 = dma.vmem_to_hbm [thread:$0]  %s136, 640, %s3, [#allocation4], 128, 128, 8
    $region21: #{_add_ln_impl.1} parent=1 // pred_fallthru
      _
    // Predicated region
    $region22: #{_add_ln_impl.1} parent=1 // pred_check
      _
    $region23: #{_add_ln_impl.1} parent=1 // pred_check_branch
      %143 = sbr.rel (0) target = $region25
    $region24: #{_add_ln_impl.1} parent=1 // pred_region
      %144 = dma.done [#allocation4], 640
    $region25: #{_add_ln_impl.1} parent=1 // pred_fallthru
      _
    %145 = vsyncpa [#allocation3], 1
    %146 = vsyncpa [#allocation4], 1

</llo_original>
